<compile_context>
chip_gen: v7x
topology: tpu7x:2x2x1
jax: 0.10.0
libtpu: 0.0.40
codegen_flags: <defaults>
</compile_context>

<pallas_src>
import functools

import jax
import jax.numpy as jnp
from jax import lax
from jax.experimental import pallas as pl
from jax.experimental.pallas import tpu as pltpu


# ---------------------------------------------------------------------------
# Kernel: NHWC layout, channels on lanes.
# ---------------------------------------------------------------------------
def _dwconv_bn_kernel(xp_ref, p_ref, o_ref, *, H, W, eps):
    """Depthwise 3x3 conv (pre-padded input) + training-mode BatchNorm.

    xp_ref: (N, H+2, W+2, TC)  zero-padded NHWC input tile
    p_ref:  (11, TC)           rows 0..8 = 3x3 taps (row-major), 9 = gamma, 10 = beta
    o_ref:  (N, H, W, TC)
    """
    xp = xp_ref[...].astype(jnp.float32)
    p = p_ref[...].astype(jnp.float32)

    # 3x3 depthwise conv as nine shifted multiply-accumulates (VPU only).
    acc = None
    for dh in range(3):
        for dw in range(3):
            tap = p[dh * 3 + dw][None, None, None, :]
            term = xp[:, dh:dh + H, dw:dw + W, :] * tap
            acc = term if acc is None else acc + term

    # Training-mode BatchNorm: per-channel batch statistics over (N, H, W),
    # two-pass (mean, centered variance) for numerical robustness.
    mean = jnp.mean(acc, axis=(0, 1, 2), keepdims=True)
    centered = acc - mean
    var = jnp.mean(centered * centered, axis=(0, 1, 2), keepdims=True)
    scale = p[9][None, None, None, :] * lax.rsqrt(var + eps)   # gamma / sqrt(var+eps)
    shift = p[10][None, None, None, :]                         # beta
    o_ref[...] = (centered * scale + shift).astype(o_ref.dtype)


# ---------------------------------------------------------------------------
# Wrapper
# ---------------------------------------------------------------------------
def _pick_tc(C, per_channel_bytes, vmem_budget_bytes=24 << 20):
    """Channel tile: prefer C/2 (two 'parallel' grid steps), keep tiles 128-aligned."""
    tc = C
    if C % 2 == 0 and (C // 2) % 128 == 0:
        tc = C // 2
    while tc % 256 == 0 and tc * per_channel_bytes > vmem_budget_bytes:
        tc //= 2
    return tc


def dwconv3x3_bn(x_nchw, weight, gamma, beta, *, eps=1e-3, tc=None):
    """x_nchw: (N, C, H, W); weight: (C, 1, 3, 3); gamma/beta: (C,). Returns NCHW."""
    N, C, H, W = x_nchw.shape
    if tc is None:
        # f32, double-buffered padded input + output tiles (per channel).
        per_channel_bytes = 4 * 4 * (N * ((H + 2) * (W + 2) + H * W))
        tc = _pick_tc(C, per_channel_bytes)
    assert C % tc == 0, "channel count must be a multiple of the channel tile"

    # Fold 3x3 taps + gamma + beta into one (11, C) side input, channels on lanes.
    params = jnp.concatenate(
        [weight.reshape(C, 9), gamma.reshape(C, 1), beta.reshape(C, 1)],
        axis=1).astype(jnp.float32).T                      # (11, C)

    x = jnp.transpose(x_nchw, (0, 2, 3, 1))                # NHWC
    xp = jnp.pad(x, ((0, 0), (1, 1), (1, 1), (0, 0)))      # spatial zero pad

    kernel = functools.partial(_dwconv_bn_kernel, H=H, W=W, eps=eps)
    out = pl.pallas_call(
        kernel,
        out_shape=jax.ShapeDtypeStruct((N, H, W, C), x.dtype),
        grid_spec=pltpu.PrefetchScalarGridSpec(
            num_scalar_prefetch=0,
            grid=(C // tc,),
            in_specs=[
                pl.BlockSpec((N, H + 2, W + 2, tc), lambda c: (0, 0, 0, c)),
                pl.BlockSpec((11, tc), lambda c: (0, c)),
            ],
            out_specs=pl.BlockSpec((N, H, W, tc), lambda c: (0, 0, 0, c)),
        ),
        compiler_params=pltpu.CompilerParams(
            dimension_semantics=("parallel",)),
    )(xp, params)
    return jnp.transpose(out, (0, 3, 1, 2))


# ---------------------------------------------------------------------------
# Pure-JAX reference and self-test
# ---------------------------------------------------------------------------
def _reference(x_nchw, weight, gamma, beta, eps=1e-3):
    C = x_nchw.shape[1]
    y = lax.conv_general_dilated(
        x_nchw, weight, window_strides=(1, 1), padding=((1, 1), (1, 1)),
        dimension_numbers=("NCHW", "OIHW", "NCHW"), feature_group_count=C,
        precision=lax.Precision.HIGHEST)
    mean = jnp.mean(y, axis=(0, 2, 3), keepdims=True)
    var = jnp.mean((y - mean) ** 2, axis=(0, 2, 3), keepdims=True)
    return (y - mean) / jnp.sqrt(var + eps) * gamma.reshape(1, -1, 1, 1) \
        + beta.reshape(1, -1, 1, 1)


if __name__ == "__main__":
    # Module shape is (1, 2304, 7, 7); use fewer channels for the test but keep
    # the real 7x7 spatial extent and exercise a batch dimension.
    N, C, H, W = 2, 256, 7, 7
    key = jax.random.PRNGKey(0)
    kx, kw, kg, kb = jax.random.split(key, 4)

    x = jax.random.normal(kx, (N, C, H, W), jnp.float32)
    weight = 0.1 * jax.random.normal(kw, (C, 1, 3, 3), jnp.float32)
    gamma = 1.0 + 0.1 * jax.random.normal(kg, (C,), jnp.float32)
    beta = 0.1 * jax.random.normal(kb, (C,), jnp.float32)

    fn = jax.jit(functools.partial(dwconv3x3_bn, eps=1e-3))
    out = jax.block_until_ready(fn(x, weight, gamma, beta))

    ref = _reference(x, weight, gamma, beta, eps=1e-3)
    assert out.shape == (N, C, H, W)
    max_err = float(jnp.max(jnp.abs(out - ref)))
    assert jnp.allclose(out, ref, atol=1e-4, rtol=1e-4), f"mismatch: {max_err}"

    print("KERNEL_OK")
</pallas_src>

<mosaic_0001>
module attributes {stable_mosaic.version = 11 : i64} {
  func.func @_dwconv_bn_kernel(%arg0: i32, %arg1: memref<2x9x9x128xf32, #tpu.memory_space<vmem>>, %arg2: memref<11x128xf32, #tpu.memory_space<vmem>>, %arg3: memref<2x7x7x128xf32, #tpu.memory_space<vmem>>) attributes {dimension_semantics = [#tpu.dimension_semantics<parallel>], iteration_bounds = array<i64: 2>, scalar_prefetch = 0 : i64, scratch_operands = 0 : i64, tpu.core_type = #tpu.core_type<tc>, window_params = [{transform_indices = @transform_0, window_bounds = array<i64: 2, 9, 9, 128>}, {transform_indices = @transform_1, window_bounds = array<i64: 11, 128>}, {transform_indices = @transform_2, window_bounds = array<i64: 2, 7, 7, 128>}]} {
    %c0 = arith.constant 0 : index
    %c0_0 = arith.constant 0 : index
    %c0_1 = arith.constant 0 : index
    %c0_2 = arith.constant 0 : index
    %0 = vector.load %arg1[%c0, %c0_0, %c0_1, %c0_2] : memref<2x9x9x128xf32, #tpu.memory_space<vmem>>, vector<2x9x9x128xf32>
    %c0_3 = arith.constant 0 : index
    %c0_4 = arith.constant 0 : index
    %1 = vector.load %arg2[%c0_3, %c0_4] : memref<11x128xf32, #tpu.memory_space<vmem>>, vector<11x128xf32>
    %2 = vector.extract_strided_slice %1 {offsets = [0, 0], sizes = [1, 128], strides = [1, 1]} : vector<11x128xf32> to vector<1x128xf32>
    %3 = vector.shape_cast %2 : vector<1x128xf32> to vector<128xf32>
    %4 = vector.shape_cast %3 : vector<128xf32> to vector<1x1x1x128xf32>
    %5 = vector.extract_strided_slice %0 {offsets = [0, 0, 0, 0], sizes = [2, 7, 7, 128], strides = [1, 1, 1, 1]} : vector<2x9x9x128xf32> to vector<2x7x7x128xf32>
    %6 = vector.broadcast %4 : vector<1x1x1x128xf32> to vector<2x7x7x128xf32>
    %7 = arith.mulf %5, %6 : vector<2x7x7x128xf32>
    %8 = vector.extract_strided_slice %1 {offsets = [1, 0], sizes = [1, 128], strides = [1, 1]} : vector<11x128xf32> to vector<1x128xf32>
    %9 = vector.shape_cast %8 : vector<1x128xf32> to vector<128xf32>
    %10 = vector.shape_cast %9 : vector<128xf32> to vector<1x1x1x128xf32>
    %11 = vector.extract_strided_slice %0 {offsets = [0, 0, 1, 0], sizes = [2, 7, 7, 128], strides = [1, 1, 1, 1]} : vector<2x9x9x128xf32> to vector<2x7x7x128xf32>
    %12 = vector.broadcast %10 : vector<1x1x1x128xf32> to vector<2x7x7x128xf32>
    %13 = arith.mulf %11, %12 : vector<2x7x7x128xf32>
    %14 = arith.addf %7, %13 : vector<2x7x7x128xf32>
    %15 = vector.extract_strided_slice %1 {offsets = [2, 0], sizes = [1, 128], strides = [1, 1]} : vector<11x128xf32> to vector<1x128xf32>
    %16 = vector.shape_cast %15 : vector<1x128xf32> to vector<128xf32>
    %17 = vector.shape_cast %16 : vector<128xf32> to vector<1x1x1x128xf32>
    %18 = vector.extract_strided_slice %0 {offsets = [0, 0, 2, 0], sizes = [2, 7, 7, 128], strides = [1, 1, 1, 1]} : vector<2x9x9x128xf32> to vector<2x7x7x128xf32>
    %19 = vector.broadcast %17 : vector<1x1x1x128xf32> to vector<2x7x7x128xf32>
    %20 = arith.mulf %18, %19 : vector<2x7x7x128xf32>
    %21 = arith.addf %14, %20 : vector<2x7x7x128xf32>
    %22 = vector.extract_strided_slice %1 {offsets = [3, 0], sizes = [1, 128], strides = [1, 1]} : vector<11x128xf32> to vector<1x128xf32>
    %23 = vector.shape_cast %22 : vector<1x128xf32> to vector<128xf32>
    %24 = vector.shape_cast %23 : vector<128xf32> to vector<1x1x1x128xf32>
    %25 = vector.extract_strided_slice %0 {offsets = [0, 1, 0, 0], sizes = [2, 7, 7, 128], strides = [1, 1, 1, 1]} : vector<2x9x9x128xf32> to vector<2x7x7x128xf32>
    %26 = vector.broadcast %24 : vector<1x1x1x128xf32> to vector<2x7x7x128xf32>
    %27 = arith.mulf %25, %26 : vector<2x7x7x128xf32>
    %28 = arith.addf %21, %27 : vector<2x7x7x128xf32>
    %29 = vector.extract_strided_slice %1 {offsets = [4, 0], sizes = [1, 128], strides = [1, 1]} : vector<11x128xf32> to vector<1x128xf32>
    %30 = vector.shape_cast %29 : vector<1x128xf32> to vector<128xf32>
    %31 = vector.shape_cast %30 : vector<128xf32> to vector<1x1x1x128xf32>
    %32 = vector.extract_strided_slice %0 {offsets = [0, 1, 1, 0], sizes = [2, 7, 7, 128], strides = [1, 1, 1, 1]} : vector<2x9x9x128xf32> to vector<2x7x7x128xf32>
    %33 = vector.broadcast %31 : vector<1x1x1x128xf32> to vector<2x7x7x128xf32>
    %34 = arith.mulf %32, %33 : vector<2x7x7x128xf32>
    %35 = arith.addf %28, %34 : vector<2x7x7x128xf32>
    %36 = vector.extract_strided_slice %1 {offsets = [5, 0], sizes = [1, 128], strides = [1, 1]} : vector<11x128xf32> to vector<1x128xf32>
    %37 = vector.shape_cast %36 : vector<1x128xf32> to vector<128xf32>
    %38 = vector.shape_cast %37 : vector<128xf32> to vector<1x1x1x128xf32>
    %39 = vector.extract_strided_slice %0 {offsets = [0, 1, 2, 0], sizes = [2, 7, 7, 128], strides = [1, 1, 1, 1]} : vector<2x9x9x128xf32> to vector<2x7x7x128xf32>
    %40 = vector.broadcast %38 : vector<1x1x1x128xf32> to vector<2x7x7x128xf32>
    %41 = arith.mulf %39, %40 : vector<2x7x7x128xf32>
    %42 = arith.addf %35, %41 : vector<2x7x7x128xf32>
    %43 = vector.extract_strided_slice %1 {offsets = [6, 0], sizes = [1, 128], strides = [1, 1]} : vector<11x128xf32> to vector<1x128xf32>
    %44 = vector.shape_cast %43 : vector<1x128xf32> to vector<128xf32>
    %45 = vector.shape_cast %44 : vector<128xf32> to vector<1x1x1x128xf32>
    %46 = vector.extract_strided_slice %0 {offsets = [0, 2, 0, 0], sizes = [2, 7, 7, 128], strides = [1, 1, 1, 1]} : vector<2x9x9x128xf32> to vector<2x7x7x128xf32>
    %47 = vector.broadcast %45 : vector<1x1x1x128xf32> to vector<2x7x7x128xf32>
    %48 = arith.mulf %46, %47 : vector<2x7x7x128xf32>
    %49 = arith.addf %42, %48 : vector<2x7x7x128xf32>
    %50 = vector.extract_strided_slice %1 {offsets = [7, 0], sizes = [1, 128], strides = [1, 1]} : vector<11x128xf32> to vector<1x128xf32>
    %51 = vector.shape_cast %50 : vector<1x128xf32> to vector<128xf32>
    %52 = vector.shape_cast %51 : vector<128xf32> to vector<1x1x1x128xf32>
    %53 = vector.extract_strided_slice %0 {offsets = [0, 2, 1, 0], sizes = [2, 7, 7, 128], strides = [1, 1, 1, 1]} : vector<2x9x9x128xf32> to vector<2x7x7x128xf32>
    %54 = vector.broadcast %52 : vector<1x1x1x128xf32> to vector<2x7x7x128xf32>
    %55 = arith.mulf %53, %54 : vector<2x7x7x128xf32>
    %56 = arith.addf %49, %55 : vector<2x7x7x128xf32>
    %57 = vector.extract_strided_slice %1 {offsets = [8, 0], sizes = [1, 128], strides = [1, 1]} : vector<11x128xf32> to vector<1x128xf32>
    %58 = vector.shape_cast %57 : vector<1x128xf32> to vector<128xf32>
    %59 = vector.shape_cast %58 : vector<128xf32> to vector<1x1x1x128xf32>
    %60 = vector.extract_strided_slice %0 {offsets = [0, 2, 2, 0], sizes = [2, 7, 7, 128], strides = [1, 1, 1, 1]} : vector<2x9x9x128xf32> to vector<2x7x7x128xf32>
    %61 = vector.broadcast %59 : vector<1x1x1x128xf32> to vector<2x7x7x128xf32>
    %62 = arith.mulf %60, %61 : vector<2x7x7x128xf32>
    %63 = arith.addf %56, %62 : vector<2x7x7x128xf32>
    %cst = arith.constant dense<0.000000e+00> : vector<128xf32>
    %64 = vector.multi_reduction <add>, %63, %cst [0, 1, 2] : vector<2x7x7x128xf32> to vector<128xf32>
    %65 = vector.shape_cast %64 : vector<128xf32> to vector<1x1x1x128xf32>
    %cst_5 = arith.constant 9.800000e+01 : f32
    %66 = vector.broadcast %cst_5 : f32 to vector<1x1x1x128xf32>
    %67 = arith.divf %65, %66 : vector<1x1x1x128xf32>
    %68 = vector.broadcast %67 : vector<1x1x1x128xf32> to vector<2x7x7x128xf32>
    %69 = arith.subf %63, %68 : vector<2x7x7x128xf32>
    %70 = arith.mulf %69, %69 : vector<2x7x7x128xf32>
    %cst_6 = arith.constant dense<0.000000e+00> : vector<128xf32>
    %71 = vector.multi_reduction <add>, %70, %cst_6 [0, 1, 2] : vector<2x7x7x128xf32> to vector<128xf32>
    %72 = vector.shape_cast %71 : vector<128xf32> to vector<1x1x1x128xf32>
    %cst_7 = arith.constant 9.800000e+01 : f32
    %73 = vector.broadcast %cst_7 : f32 to vector<1x1x1x128xf32>
    %74 = arith.divf %72, %73 : vector<1x1x1x128xf32>
    %75 = vector.extract_strided_slice %1 {offsets = [9, 0], sizes = [1, 128], strides = [1, 1]} : vector<11x128xf32> to vector<1x128xf32>
    %76 = vector.shape_cast %75 : vector<1x128xf32> to vector<128xf32>
    %77 = vector.shape_cast %76 : vector<128xf32> to vector<1x1x1x128xf32>
    %cst_8 = arith.constant 1.000000e-03 : f32
    %78 = vector.broadcast %cst_8 : f32 to vector<1x1x1x128xf32>
    %79 = arith.addf %74, %78 : vector<1x1x1x128xf32>
    %80 = math.rsqrt %79 : vector<1x1x1x128xf32>
    %81 = arith.mulf %77, %80 : vector<1x1x1x128xf32>
    %82 = vector.extract_strided_slice %1 {offsets = [10, 0], sizes = [1, 128], strides = [1, 1]} : vector<11x128xf32> to vector<1x128xf32>
    %83 = vector.shape_cast %82 : vector<1x128xf32> to vector<128xf32>
    %84 = vector.shape_cast %83 : vector<128xf32> to vector<1x1x1x128xf32>
    %85 = vector.broadcast %81 : vector<1x1x1x128xf32> to vector<2x7x7x128xf32>
    %86 = arith.mulf %69, %85 : vector<2x7x7x128xf32>
    %87 = vector.broadcast %84 : vector<1x1x1x128xf32> to vector<2x7x7x128xf32>
    %88 = arith.addf %86, %87 : vector<2x7x7x128xf32>
    %c0_9 = arith.constant 0 : index
    %c0_10 = arith.constant 0 : index
    %c0_11 = arith.constant 0 : index
    %c0_12 = arith.constant 0 : index
    %89 = vector.load %arg3[%c0_9, %c0_10, %c0_11, %c0_12] : memref<2x7x7x128xf32, #tpu.memory_space<vmem>>, vector<2x7x7x128xf32>
    tpu.vector_store %arg3[%c0_9, %c0_10, %c0_11, %c0_12], %88 {strides = array<i32>} : memref<2x7x7x128xf32, #tpu.memory_space<vmem>>, vector<2x7x7x128xf32>,
    return
  }
  func.func @transform_0(%arg0: i32) -> (i32, i32, i32, i32) {
    %c0_i32 = arith.constant 0 : i32
    %c0_i32_0 = arith.constant 0 : i32
    %c0_i32_1 = arith.constant 0 : i32
    %c0_i32_2 = arith.constant 0 : i32
    return %c0_i32, %c0_i32_0, %c0_i32_1, %arg0 : i32, i32, i32, i32
  }
  func.func @transform_1(%arg0: i32) -> (i32, i32) {
    %c0_i32 = arith.constant 0 : i32
    %c0_i32_0 = arith.constant 0 : i32
    return %c0_i32, %arg0 : i32, i32
  }
  func.func @transform_2(%arg0: i32) -> (i32, i32, i32, i32) {
    %c0_i32 = arith.constant 0 : i32
    %c0_i32_0 = arith.constant 0 : i32
    %c0_i32_1 = arith.constant 0 : i32
    %c0_i32_2 = arith.constant 0 : i32
    return %c0_i32, %c0_i32_0, %c0_i32_1, %arg0 : i32, i32, i32, i32
  }
}

</mosaic_0001>

<llo_original>
// kernel: dwconv3x3_bn.1
$region0: #{dwconv3x3_bn.1}
  #allocation0 [shape = 'u32[]', space=smem, size = 0x4, offset = 0x4, fixed_abs, tag = 'smem constant byte address 0x4 - core index']
  #allocation1 [shape = 'u32[144,128]{1,0:T(1,128)}', space=vmem, size = 0x12000, scoped, tag = 'internal scratch']
  %s0 = inlined_call_operand.vmem [shape: f32[2,9,9,256], index: 0, kind: input, shape index: {}]
  %s1 = inlined_call_operand.vmem [shape: f32[11,256], index: 1, kind: input, shape index: {}]
  %s2 = inlined_call_operand.vmem [shape: f32[2,7,7,256], index: 2, kind: output, shape index: {}]
  %s3 = sld [smem:[#allocation0]]
  $region151: #{dwconv3x3_bn.1} parent=0
    _
  %s5 = ssub.s32 1, %s3
  %s6 = scalar_select 0, %s5, %s3
  $region1: #{dwconv3x3_bn.1} parent=0
    #allocation2 [shape = 'u8[294912]{0}', space=vmem, size = 0x48000, scoped, tag = 'input window, operand 0']
    #allocation3 [shape = 'u8[16384]{0}', space=vmem, size = 0x4000, scoped, tag = 'input window, operand 1']
    #allocation4 [shape = 'u8[114688]{0}', space=vmem, size = 0x1c000, scoped, tag = 'output window, operand 0']
    loop: start=0, step=1, limit=4
    $region2: #{dwconv3x3_bn.1} parent=1 // loop_pre_header
      _
    $region3: #{dwconv3x3_bn.1} parent=1 // loop_header
      %s8 = sphi 0, %s12
      %p9 = scmp.ge.s32.totalorder %s8, 4
      %s18 = sphi 0, %s20
      %s21 = sphi 0, %s18
      %s22 = sphi 0, %s21
      %s38 = sphi 0, %s22
      %s44 = sphi 0, %s46
      %s47 = sphi 0, %s44
      %s48 = sphi 0, %s47
      %s64 = sphi 0, %s48
      %s70 = sphi 0, %s72
      %s73 = sphi 0, %s70
      %s74 = sphi 0, %s73
      %s90 = sphi 0, %s74
    $region4: #{dwconv3x3_bn.1} parent=1 // loop_header_branch
      %11 = sbr.rel (%p9) target = $region8
    $region5: #{dwconv3x3_bn.1} parent=1 // loop_body
      %s13 = ssub.s32 %s8, 1
      %s14 = ssub.s32 %s8, 2
      %s15 = sadd.s32 %s8, 1
      %s16 = ssub.s32 %s8, %s15
      %p17 = scmp.eq.s32.totalorder %s16, 0
      %s19 = sadd.s32 %s18, 1
      %s20 = scalar_select %p17, %s18, %s19
      %p23 = pneg %p17
      %p24 = scmp.eq.s32.totalorder %s8, 1
      %p25 = por %p23, %p24
      %p26 = scmp.ne.s32.totalorder %s18, %s21
      %p27 = scmp.eq.s32.totalorder %s8, 0
      %p28 = por %p26, %p27
      %p29 = scmp.ne.s32.totalorder %s18, %s21
      %p30 = scmp.eq.s32.totalorder %s13, 1
      %p31 = por %p29, %p30
      %p32 = scmp.ne.s32.totalorder %s21, %s22
      %p33 = scmp.eq.s32.totalorder %s13, 0
      %p34 = por %p32, %p33
      %p35 = scmp.ne.s32.totalorder %s21, %s22
      %p36 = scmp.eq.s32.totalorder %s14, 1
      %p37 = por %p35, %p36
      %p39 = scmp.ne.s32.totalorder %s22, %s38
      %p40 = scmp.eq.s32.totalorder %s14, 0
      %p41 = por %p39, %p40
      %s42 = ssub.s32 %s8, %s15
      %p43 = scmp.eq.s32.totalorder %s42, 0
      %s45 = sadd.s32 %s44, 1
      %s46 = scalar_select %p43, %s44, %s45
      %p49 = pneg %p43
      %p50 = scmp.eq.s32.totalorder %s8, 1
      %p51 = por %p49, %p50
      %p52 = scmp.ne.s32.totalorder %s44, %s47
      %p53 = scmp.eq.s32.totalorder %s8, 0
      %p54 = por %p52, %p53
      %p55 = scmp.ne.s32.totalorder %s44, %s47
      %p56 = scmp.eq.s32.totalorder %s13, 1
      %p57 = por %p55, %p56
      %p58 = scmp.ne.s32.totalorder %s47, %s48
      %p59 = scmp.eq.s32.totalorder %s13, 0
      %p60 = por %p58, %p59
      %p61 = scmp.ne.s32.totalorder %s47, %s48
      %p62 = scmp.eq.s32.totalorder %s14, 1
      %p63 = por %p61, %p62
      %p65 = scmp.ne.s32.totalorder %s48, %s64
      %p66 = scmp.eq.s32.totalorder %s14, 0
      %p67 = por %p65, %p66
      %s68 = ssub.s32 %s8, %s15
      %p69 = scmp.eq.s32.totalorder %s68, 0
      %s71 = sadd.s32 %s70, 1
      %s72 = scalar_select %p69, %s70, %s71
      %p75 = pneg %p69
      %p76 = scmp.eq.s32.totalorder %s8, 1
      %p77 = por %p75, %p76
      %p78 = scmp.ne.s32.totalorder %s70, %s73
      %p79 = scmp.eq.s32.totalorder %s8, 0
      %p80 = por %p78, %p79
      %p81 = scmp.ne.s32.totalorder %s70, %s73
      %p82 = scmp.eq.s32.totalorder %s13, 1
      %p83 = por %p81, %p82
      %p84 = scmp.ne.s32.totalorder %s73, %s74
      %p85 = scmp.eq.s32.totalorder %s13, 0
      %p86 = por %p84, %p85
      %p87 = scmp.ne.s32.totalorder %s73, %s74
      %p88 = scmp.eq.s32.totalorder %s14, 1
      %p89 = por %p87, %p88
      %p91 = scmp.ne.s32.totalorder %s74, %s90
      %p92 = scmp.eq.s32.totalorder %s14, 0
      %p93 = por %p91, %p92
      %p94 = scmp.le.s32.totalorder 1, %s8
      %p95 = scmp.lt.s32.totalorder %s8, 3
      %p96 = pnand %p94, %p95
      %p97 = pneg %p96
      // Predicated region
      $region9: #{dwconv3x3_bn.1} parent=5 // pred_check
        _
      $region10: #{dwconv3x3_bn.1} parent=5 // pred_check_branch
        %99 = sbr.rel (%p96) target = $region12
      $region11: #{dwconv3x3_bn.1} parent=5 // pred_region
        %s100 = ssub.s32 %s8, 1
      $region12: #{dwconv3x3_bn.1} parent=5 // pred_fallthru
        _
      %p101 = scmp.lt.s32.totalorder %s8, 2
      // Predicated region
      $region13: #{dwconv3x3_bn.1} parent=5 // pred_check
        %p102 = pneg %p101
      $region14: #{dwconv3x3_bn.1} parent=5 // pred_check_branch
        %104 = sbr.rel (%p102) target = $region16
      $region15: #{dwconv3x3_bn.1} parent=5 // pred_region
        // Predicated region
        $region17: #{dwconv3x3_bn.1} parent=15 // pred_check
          %p105 = pneg %p28
        $region18: #{dwconv3x3_bn.1} parent=15 // pred_check_branch
          %107 = sbr.rel (%p105) target = $region20
        $region19: #{dwconv3x3_bn.1} parent=15 // pred_region
          %s108 = sand.u32 %s18, 1
          %s109 = sand.u32 %s18, 1
          %s110 = smul.addr %s109, 288
          %s111 = scalar_lea.vmem [#allocation2], %s110
          %s112 = smul.addr %s8, 8
          %s113 = scalar_lea.vmem %s0, %s112
          // Predicated region
          $region21: #{dwconv3x3_bn.1} parent=19 // pred_check
            _
          $region22: #{dwconv3x3_bn.1} parent=19 // pred_check_branch
            %115 = sbr.rel (0) target = $region24
          $region23: #{dwconv3x3_bn.1} parent=19 // pred_region
            // Predicated region
            $region25: #{dwconv3x3_bn.1} parent=23 // pred_check
              _
            $region26: #{dwconv3x3_bn.1} parent=23 // pred_check_branch
              %117 = sbr.rel (0) target = $region28
            $region27: #{dwconv3x3_bn.1} parent=23 // pred_region
              // Predicated region
              $region40: #{dwconv3x3_bn.1} parent=27 // pred_check
                _
              $region41: #{dwconv3x3_bn.1} parent=27 // pred_check_branch
                %202 = sbr.rel (0) target = $region43
              $region42: #{dwconv3x3_bn.1} parent=27 // pred_region
                loop: start=0, step=1, limit=1
                $region44: #{dwconv3x3_bn.1} parent=42 // loop_pre_header
                  _
                $region45: #{dwconv3x3_bn.1} parent=42 // loop_header
                  %s204 = sphi 0, %s208
                  %p205 = scmp.ge.s32.totalorder %s204, 1
                  %s209 = sphi %s113, %s113
                  %s210 = sphi %s111, %s111
                $region46: #{dwconv3x3_bn.1} parent=42 // loop_header_branch
                  %207 = sbr.rel (%p205) target = $region50
                $region47: #{dwconv3x3_bn.1} parent=42 // loop_body
                  %v211 = vld [vmem:[%s209] sm:$0xff]
                  %212 = vst [vmem:[%s210] sm:$0xff] %v211
                  %v213 = vld [vmem:[%s209 + $0x10] sm:$0xff]
                  %214 = vst [vmem:[%s210 + $0x8] sm:$0xff] %v213
                  %v215 = vld [vmem:[%s209 + $0x20] sm:$0xff]
                  %216 = vst [vmem:[%s210 + $0x10] sm:$0xff] %v215
                  %v217 = vld [vmem:[%s209 + $0x30] sm:$0xff]
                  %218 = vst [vmem:[%s210 + $0x18] sm:$0xff] %v217
                  %v219 = vld [vmem:[%s209 + $0x40] sm:$0xff]
                  %220 = vst [vmem:[%s210 + $0x20] sm:$0xff] %v219
                  %v221 = vld [vmem:[%s209 + $0x50] sm:$0xff]
                  %222 = vst [vmem:[%s210 + $0x28] sm:$0xff] %v221
                  %v223 = vld [vmem:[%s209 + $0x60] sm:$0xff]
                  %224 = vst [vmem:[%s210 + $0x30] sm:$0xff] %v223
                  %v225 = vld [vmem:[%s209 + $0x70] sm:$0xff]
                  %226 = vst [vmem:[%s210 + $0x38] sm:$0xff] %v225
                  %v227 = vld [vmem:[%s209 + $0x80] sm:$0xff]
                  %228 = vst [vmem:[%s210 + $0x40] sm:$0xff] %v227
                  %v229 = vld [vmem:[%s209 + $0x90] sm:$0xff]
                  %230 = vst [vmem:[%s210 + $0x48] sm:$0xff] %v229
                  %v231 = vld [vmem:[%s209 + $0xa0] sm:$0xff]
                  %232 = vst [vmem:[%s210 + $0x50] sm:$0xff] %v231
                  %v233 = vld [vmem:[%s209 + $0xb0] sm:$0xff]
                  %234 = vst [vmem:[%s210 + $0x58] sm:$0xff] %v233
                  %v235 = vld [vmem:[%s209 + $0xc0] sm:$0xff]
                  %236 = vst [vmem:[%s210 + $0x60] sm:$0xff] %v235
                  %v237 = vld [vmem:[%s209 + $0xd0] sm:$0xff]
                  %238 = vst [vmem:[%s210 + $0x68] sm:$0xff] %v237
                  %v239 = vld [vmem:[%s209 + $0xe0] sm:$0xff]
                  %240 = vst [vmem:[%s210 + $0x70] sm:$0xff] %v239
                  %v241 = vld [vmem:[%s209 + $0xf0] sm:$0xff]
                  %242 = vst [vmem:[%s210 + $0x78] sm:$0xff] %v241
                  %v243 = vld [vmem:[%s209 + $0x100] sm:$0xff]
                  %244 = vst [vmem:[%s210 + $0x80] sm:$0xff] %v243
                  %v245 = vld [vmem:[%s209 + $0x110] sm:$0xff]
                  %246 = vst [vmem:[%s210 + $0x88] sm:$0xff] %v245
                  %v247 = vld [vmem:[%s209 + $0x120] sm:$0xff]
                  %248 = vst [vmem:[%s210 + $0x90] sm:$0xff] %v247
                  %v249 = vld [vmem:[%s209 + $0x130] sm:$0xff]
                  %250 = vst [vmem:[%s210 + $0x98] sm:$0xff] %v249
                  %v251 = vld [vmem:[%s209 + $0x140] sm:$0xff]
                  %252 = vst [vmem:[%s210 + $0xa0] sm:$0xff] %v251
                  %v253 = vld [vmem:[%s209 + $0x150] sm:$0xff]
                  %254 = vst [vmem:[%s210 + $0xa8] sm:$0xff] %v253
                  %v255 = vld [vmem:[%s209 + $0x160] sm:$0xff]
                  %256 = vst [vmem:[%s210 + $0xb0] sm:$0xff] %v255
                  %v257 = vld [vmem:[%s209 + $0x170] sm:$0xff]
                  %258 = vst [vmem:[%s210 + $0xb8] sm:$0xff] %v257
                  %v259 = vld [vmem:[%s209 + $0x180] sm:$0xff]
                  %260 = vst [vmem:[%s210 + $0xc0] sm:$0xff] %v259
                  %v261 = vld [vmem:[%s209 + $0x190] sm:$0xff]
                  %262 = vst [vmem:[%s210 + $0xc8] sm:$0xff] %v261
                  %v263 = vld [vmem:[%s209 + $0x1a0] sm:$0xff]
                  %264 = vst [vmem:[%s210 + $0xd0] sm:$0xff] %v263
                  %v265 = vld [vmem:[%s209 + $0x1b0] sm:$0xff]
                  %266 = vst [vmem:[%s210 + $0xd8] sm:$0xff] %v265
                  %v267 = vld [vmem:[%s209 + $0x1c0] sm:$0xff]
                  %268 = vst [vmem:[%s210 + $0xe0] sm:$0xff] %v267
                  %v269 = vld [vmem:[%s209 + $0x1d0] sm:$0xff]
                  %270 = vst [vmem:[%s210 + $0xe8] sm:$0xff] %v269
                  %v271 = vld [vmem:[%s209 + $0x1e0] sm:$0xff]
                  %272 = vst [vmem:[%s210 + $0xf0] sm:$0xff] %v271
                  %v273 = vld [vmem:[%s209 + $0x1f0] sm:$0xff]
                  %274 = vst [vmem:[%s210 + $0xf8] sm:$0xff] %v273
                  %v275 = vld [vmem:[%s209 + $0x200] sm:$0xff]
                  %276 = vst [vmem:[%s210 + $0x100] sm:$0xff] %v275
                  %v277 = vld [vmem:[%s209 + $0x210] sm:$0xff]
                  %278 = vst [vmem:[%s210 + $0x108] sm:$0xff] %v277
                  %v279 = vld [vmem:[%s209 + $0x220] sm:$0xff]
                  %280 = vst [vmem:[%s210 + $0x110] sm:$0xff] %v279
                  %v281 = vld [vmem:[%s209 + $0x230] sm:$0xff]
                  %282 = vst [vmem:[%s210 + $0x118] sm:$0xff] %v281
                $region48: #{dwconv3x3_bn.1} parent=42 // loop_footer
                  %s208 = sadd.s32 1, %s204
                $region49: #{dwconv3x3_bn.1} parent=42 // loop_footer_branch
                  %203 = sbr.rel target = $region45
                $region50: #{dwconv3x3_bn.1} parent=42 // loop_exit
                  _
              $region43: #{dwconv3x3_bn.1} parent=27 // pred_fallthru
                _
              // Predicated region
              $region51: #{dwconv3x3_bn.1} parent=27 // pred_check
                _
              $region52: #{dwconv3x3_bn.1} parent=27 // pred_check_branch
                %284 = sbr.rel target = $region54
              $region53: #{dwconv3x3_bn.1} parent=27 // pred_region
                _
              $region54: #{dwconv3x3_bn.1} parent=27 // pred_fallthru
                _
            $region28: #{dwconv3x3_bn.1} parent=23 // pred_fallthru
              _
            // Predicated region
            $region29: #{dwconv3x3_bn.1} parent=23 // pred_check
              _
            $region30: #{dwconv3x3_bn.1} parent=23 // pred_check_branch
              %119 = sbr.rel target = $region32
            $region31: #{dwconv3x3_bn.1} parent=23 // pred_region
              loop: start=0, step=1, limit=1
              $region33: #{dwconv3x3_bn.1} parent=31 // loop_pre_header
                _
              $region34: #{dwconv3x3_bn.1} parent=31 // loop_header
                %s122 = sphi 0, %s126
                %p123 = scmp.ge.s32.totalorder %s122, 1
                %s127 = sphi %s113, %s113
                %s128 = sphi %s111, %s111
              $region35: #{dwconv3x3_bn.1} parent=31 // loop_header_branch
                %125 = sbr.rel (%p123) target = $region39
              $region36: #{dwconv3x3_bn.1} parent=31 // loop_body
                %v129 = vld [vmem:[%s127] sm:$0xff]
                %130 = vst [vmem:[%s128] sm:$0xff] %v129
                %v131 = vld [vmem:[%s127 + $0x10] sm:$0xff]
                %132 = vst [vmem:[%s128 + $0x8] sm:$0xff] %v131
                %v133 = vld [vmem:[%s127 + $0x20] sm:$0xff]
                %134 = vst [vmem:[%s128 + $0x10] sm:$0xff] %v133
                %v135 = vld [vmem:[%s127 + $0x30] sm:$0xff]
                %136 = vst [vmem:[%s128 + $0x18] sm:$0xff] %v135
                %v137 = vld [vmem:[%s127 + $0x40] sm:$0xff]
                %138 = vst [vmem:[%s128 + $0x20] sm:$0xff] %v137
                %v139 = vld [vmem:[%s127 + $0x50] sm:$0xff]
                %140 = vst [vmem:[%s128 + $0x28] sm:$0xff] %v139
                %v141 = vld [vmem:[%s127 + $0x60] sm:$0xff]
                %142 = vst [vmem:[%s128 + $0x30] sm:$0xff] %v141
                %v143 = vld [vmem:[%s127 + $0x70] sm:$0xff]
                %144 = vst [vmem:[%s128 + $0x38] sm:$0xff] %v143
                %v145 = vld [vmem:[%s127 + $0x80] sm:$0xff]
                %146 = vst [vmem:[%s128 + $0x40] sm:$0xff] %v145
                %v147 = vld [vmem:[%s127 + $0x90] sm:$0xff]
                %148 = vst [vmem:[%s128 + $0x48] sm:$0xff] %v147
                %v149 = vld [vmem:[%s127 + $0xa0] sm:$0xff]
                %150 = vst [vmem:[%s128 + $0x50] sm:$0xff] %v149
                %v151 = vld [vmem:[%s127 + $0xb0] sm:$0xff]
                %152 = vst [vmem:[%s128 + $0x58] sm:$0xff] %v151
                %v153 = vld [vmem:[%s127 + $0xc0] sm:$0xff]
                %154 = vst [vmem:[%s128 + $0x60] sm:$0xff] %v153
                %v155 = vld [vmem:[%s127 + $0xd0] sm:$0xff]
                %156 = vst [vmem:[%s128 + $0x68] sm:$0xff] %v155
                %v157 = vld [vmem:[%s127 + $0xe0] sm:$0xff]
                %158 = vst [vmem:[%s128 + $0x70] sm:$0xff] %v157
                %v159 = vld [vmem:[%s127 + $0xf0] sm:$0xff]
                %160 = vst [vmem:[%s128 + $0x78] sm:$0xff] %v159
                %v161 = vld [vmem:[%s127 + $0x100] sm:$0xff]
                %162 = vst [vmem:[%s128 + $0x80] sm:$0xff] %v161
                %v163 = vld [vmem:[%s127 + $0x110] sm:$0xff]
                %164 = vst [vmem:[%s128 + $0x88] sm:$0xff] %v163
                %v165 = vld [vmem:[%s127 + $0x120] sm:$0xff]
                %166 = vst [vmem:[%s128 + $0x90] sm:$0xff] %v165
                %v167 = vld [vmem:[%s127 + $0x130] sm:$0xff]
                %168 = vst [vmem:[%s128 + $0x98] sm:$0xff] %v167
                %v169 = vld [vmem:[%s127 + $0x140] sm:$0xff]
                %170 = vst [vmem:[%s128 + $0xa0] sm:$0xff] %v169
                %v171 = vld [vmem:[%s127 + $0x150] sm:$0xff]
                %172 = vst [vmem:[%s128 + $0xa8] sm:$0xff] %v171
                %v173 = vld [vmem:[%s127 + $0x160] sm:$0xff]
                %174 = vst [vmem:[%s128 + $0xb0] sm:$0xff] %v173
                %v175 = vld [vmem:[%s127 + $0x170] sm:$0xff]
                %176 = vst [vmem:[%s128 + $0xb8] sm:$0xff] %v175
                %v177 = vld [vmem:[%s127 + $0x180] sm:$0xff]
                %178 = vst [vmem:[%s128 + $0xc0] sm:$0xff] %v177
                %v179 = vld [vmem:[%s127 + $0x190] sm:$0xff]
                %180 = vst [vmem:[%s128 + $0xc8] sm:$0xff] %v179
                %v181 = vld [vmem:[%s127 + $0x1a0] sm:$0xff]
                %182 = vst [vmem:[%s128 + $0xd0] sm:$0xff] %v181
                %v183 = vld [vmem:[%s127 + $0x1b0] sm:$0xff]
                %184 = vst [vmem:[%s128 + $0xd8] sm:$0xff] %v183
                %v185 = vld [vmem:[%s127 + $0x1c0] sm:$0xff]
                %186 = vst [vmem:[%s128 + $0xe0] sm:$0xff] %v185
                %v187 = vld [vmem:[%s127 + $0x1d0] sm:$0xff]
                %188 = vst [vmem:[%s128 + $0xe8] sm:$0xff] %v187
                %v189 = vld [vmem:[%s127 + $0x1e0] sm:$0xff]
                %190 = vst [vmem:[%s128 + $0xf0] sm:$0xff] %v189
                %v191 = vld [vmem:[%s127 + $0x1f0] sm:$0xff]
                %192 = vst [vmem:[%s128 + $0xf8] sm:$0xff] %v191
                %v193 = vld [vmem:[%s127 + $0x200] sm:$0xff]
                %194 = vst [vmem:[%s128 + $0x100] sm:$0xff] %v193
                %v195 = vld [vmem:[%s127 + $0x210] sm:$0xff]
                %196 = vst [vmem:[%s128 + $0x108] sm:$0xff] %v195
                %v197 = vld [vmem:[%s127 + $0x220] sm:$0xff]
                %198 = vst [vmem:[%s128 + $0x110] sm:$0xff] %v197
                %v199 = vld [vmem:[%s127 + $0x230] sm:$0xff]
                %200 = vst [vmem:[%s128 + $0x118] sm:$0xff] %v199
              $region37: #{dwconv3x3_bn.1} parent=31 // loop_footer
                %s126 = sadd.s32 1, %s122
              $region38: #{dwconv3x3_bn.1} parent=31 // loop_footer_branch
                %121 = sbr.rel target = $region34
              $region39: #{dwconv3x3_bn.1} parent=31 // loop_exit
                _
            $region32: #{dwconv3x3_bn.1} parent=23 // pred_fallthru
              _
          $region24: #{dwconv3x3_bn.1} parent=19 // pred_fallthru
            _
          %285 = vnop
        $region20: #{dwconv3x3_bn.1} parent=15 // pred_fallthru
          _
        // Predicated region
        $region55: #{dwconv3x3_bn.1} parent=15 // pred_check
          %p286 = pneg %p54
        $region56: #{dwconv3x3_bn.1} parent=15 // pred_check_branch
          %288 = sbr.rel (%p286) target = $region58
        $region57: #{dwconv3x3_bn.1} parent=15 // pred_region
          %s289 = sand.u32 %s44, 1
          %s290 = sand.u32 %s44, 1
          %s291 = smul.addr %s290, 16
          %s292 = scalar_lea.vmem [#allocation3], %s291
          %s293 = smul.addr %s8, 8
          %s294 = scalar_lea.vmem %s1, %s293
          // Predicated region
          $region59: #{dwconv3x3_bn.1} parent=57 // pred_check
            _
          $region60: #{dwconv3x3_bn.1} parent=57 // pred_check_branch
            %296 = sbr.rel (0) target = $region62
          $region61: #{dwconv3x3_bn.1} parent=57 // pred_region
            // Predicated region
            $region63: #{dwconv3x3_bn.1} parent=61 // pred_check
              _
            $region64: #{dwconv3x3_bn.1} parent=61 // pred_check_branch
              %298 = sbr.rel (0) target = $region66
            $region65: #{dwconv3x3_bn.1} parent=61 // pred_region
              // Predicated region
              $region78: #{dwconv3x3_bn.1} parent=65 // pred_check
                _
              $region79: #{dwconv3x3_bn.1} parent=65 // pred_check_branch
                %315 = sbr.rel (0) target = $region81
              $region80: #{dwconv3x3_bn.1} parent=65 // pred_region
                loop: start=0, step=1, limit=1
                $region82: #{dwconv3x3_bn.1} parent=80 // loop_pre_header
                  _
                $region83: #{dwconv3x3_bn.1} parent=80 // loop_header
                  %s317 = sphi 0, %s321
                  %p318 = scmp.ge.s32.totalorder %s317, 1
                  %s322 = sphi %s294, %s294
                  %s323 = sphi %s292, %s292
                $region84: #{dwconv3x3_bn.1} parent=80 // loop_header_branch
                  %320 = sbr.rel (%p318) target = $region88
                $region85: #{dwconv3x3_bn.1} parent=80 // loop_body
                  %v324 = vld [vmem:[%s322] sm:$0xff]
                  %325 = vst [vmem:[%s323] sm:$0xff] %v324
                  %v326 = vld [vmem:[%s322 + $0x10] sm:$0xff]
                  %327 = vst [vmem:[%s323 + $0x8] sm:$0xff] %v326
                $region86: #{dwconv3x3_bn.1} parent=80 // loop_footer
                  %s321 = sadd.s32 1, %s317
                $region87: #{dwconv3x3_bn.1} parent=80 // loop_footer_branch
                  %316 = sbr.rel target = $region83
                $region88: #{dwconv3x3_bn.1} parent=80 // loop_exit
                  _
              $region81: #{dwconv3x3_bn.1} parent=65 // pred_fallthru
                _
              // Predicated region
              $region89: #{dwconv3x3_bn.1} parent=65 // pred_check
                _
              $region90: #{dwconv3x3_bn.1} parent=65 // pred_check_branch
                %329 = sbr.rel target = $region92
              $region91: #{dwconv3x3_bn.1} parent=65 // pred_region
                _
              $region92: #{dwconv3x3_bn.1} parent=65 // pred_fallthru
                _
            $region66: #{dwconv3x3_bn.1} parent=61 // pred_fallthru
              _
            // Predicated region
            $region67: #{dwconv3x3_bn.1} parent=61 // pred_check
              _
            $region68: #{dwconv3x3_bn.1} parent=61 // pred_check_branch
              %300 = sbr.rel target = $region70
            $region69: #{dwconv3x3_bn.1} parent=61 // pred_region
              loop: start=0, step=1, limit=1
              $region71: #{dwconv3x3_bn.1} parent=69 // loop_pre_header
                _
              $region72: #{dwconv3x3_bn.1} parent=69 // loop_header
                %s303 = sphi 0, %s307
                %p304 = scmp.ge.s32.totalorder %s303, 1
                %s308 = sphi %s294, %s294
                %s309 = sphi %s292, %s292
              $region73: #{dwconv3x3_bn.1} parent=69 // loop_header_branch
                %306 = sbr.rel (%p304) target = $region77
              $region74: #{dwconv3x3_bn.1} parent=69 // loop_body
                %v310 = vld [vmem:[%s308] sm:$0xff]
                %311 = vst [vmem:[%s309] sm:$0xff] %v310
                %v312 = vld [vmem:[%s308 + $0x10] sm:$0xff]
                %313 = vst [vmem:[%s309 + $0x8] sm:$0xff] %v312
              $region75: #{dwconv3x3_bn.1} parent=69 // loop_footer
                %s307 = sadd.s32 1, %s303
              $region76: #{dwconv3x3_bn.1} parent=69 // loop_footer_branch
                %302 = sbr.rel target = $region72
              $region77: #{dwconv3x3_bn.1} parent=69 // loop_exit
                _
            $region70: #{dwconv3x3_bn.1} parent=61 // pred_fallthru
              _
          $region62: #{dwconv3x3_bn.1} parent=57 // pred_fallthru
            _
          %330 = vnop
        $region58: #{dwconv3x3_bn.1} parent=15 // pred_fallthru
          _
      $region16: #{dwconv3x3_bn.1} parent=5 // pred_fallthru
        _
      %p331 = scmp.le.s32.totalorder 1, %s8
      %p332 = scmp.lt.s32.totalorder %s8, 3
      %p333 = pnand %p331, %p332
      %p334 = pneg %p333
      // Predicated region
      $region93: #{dwconv3x3_bn.1} parent=5 // pred_check
        _
      $region94: #{dwconv3x3_bn.1} parent=5 // pred_check_branch
        %336 = sbr.rel (%p333) target = $region96
      $region95: #{dwconv3x3_bn.1} parent=5 // pred_region
        %s337 = ssub.s32 %s8, 1
        %s338 = sand.u32 %s21, 1
        %s339 = sand.u32 %s21, 1
        %s340 = smul.addr %s339, 288
        %s341 = scalar_lea.vmem [#allocation2], %s340
        // Predicated region
        $region97: #{dwconv3x3_bn.1} parent=95 // pred_check
          %p342 = pneg %p34
        $region98: #{dwconv3x3_bn.1} parent=95 // pred_check_branch
          %344 = sbr.rel (%p342) target = $region100
        $region99: #{dwconv3x3_bn.1} parent=95 // pred_region
          _
        $region100: #{dwconv3x3_bn.1} parent=95 // pred_fallthru
          _
        %s345 = sand.u32 %s47, 1
        %s346 = sand.u32 %s47, 1
        %s347 = smul.addr %s346, 16
        %s348 = scalar_lea.vmem [#allocation3], %s347
        // Predicated region
        $region101: #{dwconv3x3_bn.1} parent=95 // pred_check
          %p349 = pneg %p60
        $region102: #{dwconv3x3_bn.1} parent=95 // pred_check_branch
          %351 = sbr.rel (%p349) target = $region104
        $region103: #{dwconv3x3_bn.1} parent=95 // pred_region
          _
        $region104: #{dwconv3x3_bn.1} parent=95 // pred_fallthru
          _
        %s352 = sand.u32 %s21, 1
        %s353 = sand.u32 %s21, 1
        %s354 = smul.addr %s353, 288
        %s355 = scalar_lea.vmem [#allocation2], %s354
        %p356 = pneg %p34
        %p357 = pneg %p31
        %s358 = sand.u32 %s47, 1
        %s359 = sand.u32 %s47, 1
        %s360 = smul.addr %s359, 16
        %s361 = scalar_lea.vmem [#allocation3], %s360
        %p362 = pneg %p60
        %p363 = pneg %p57
        %p364 = pneg %p86
        %p365 = pneg %p83
        %s366 = sand.u32 %s73, 1
        %s367 = sand.u32 %s73, 1
        %s368 = smul.addr %s367, 112
        %s369 = scalar_lea.vmem [#allocation4], %s368
        %v370 = vld [vmem:[%s341] sm:$0xff]
        %v371 = vld [vmem:[%s341 + $0x8] sm:$0x1]
        %v372 = vld [vmem:[%s341 + $0x10] sm:$0xff]
        %v373 = vld [vmem:[%s341 + $0x18] sm:$0x1]
        %v374 = vld [vmem:[%s341 + $0x20] sm:$0xff]
        %v375 = vld [vmem:[%s341 + $0x28] sm:$0x1]
        %v376 = vld [vmem:[%s341 + $0x30] sm:$0xff]
        %v377 = vld [vmem:[%s341 + $0x38] sm:$0x1]
        %v378 = vld [vmem:[%s341 + $0x40] sm:$0xff]
        %v379 = vld [vmem:[%s341 + $0x48] sm:$0x1]
        %v380 = vld [vmem:[%s341 + $0x50] sm:$0xff]
        %v381 = vld [vmem:[%s341 + $0x58] sm:$0x1]
        %v382 = vld [vmem:[%s341 + $0x60] sm:$0xff]
        %v383 = vld [vmem:[%s341 + $0x68] sm:$0x1]
        %v384 = vld [vmem:[%s341 + $0x70] sm:$0xff]
        %v385 = vld [vmem:[%s341 + $0x78] sm:$0x1]
        %v386 = vld [vmem:[%s341 + $0x80] sm:$0xff]
        %v387 = vld [vmem:[%s341 + $0x88] sm:$0x1]
        %v388 = vld [vmem:[%s341 + $0x90] sm:$0xff]
        %v389 = vld [vmem:[%s341 + $0x98] sm:$0x1]
        %v390 = vld [vmem:[%s341 + $0xa0] sm:$0xff]
        %v391 = vld [vmem:[%s341 + $0xa8] sm:$0x1]
        %v392 = vld [vmem:[%s341 + $0xb0] sm:$0xff]
        %v393 = vld [vmem:[%s341 + $0xb8] sm:$0x1]
        %v394 = vld [vmem:[%s341 + $0xc0] sm:$0xff]
        %v395 = vld [vmem:[%s341 + $0xc8] sm:$0x1]
        %v396 = vld [vmem:[%s341 + $0xd0] sm:$0xff]
        %v397 = vld [vmem:[%s341 + $0xd8] sm:$0x1]
        %v398 = vld [vmem:[%s341 + $0xe0] sm:$0xff]
        %v399 = vld [vmem:[%s341 + $0xe8] sm:$0x1]
        %v400 = vld [vmem:[%s341 + $0xf0] sm:$0xff]
        %v401 = vld [vmem:[%s341 + $0xf8] sm:$0x1]
        %v402 = vld [vmem:[%s341 + $0x100] sm:$0xff]
        %v403 = vld [vmem:[%s341 + $0x108] sm:$0x1]
        %v404 = vld [vmem:[%s341 + $0x110] sm:$0xff]
        %v405 = vld [vmem:[%s341 + $0x118] sm:$0x1]
        %v406 = vld [vmem:[%s348] sm:$0xff]
        %v407 = vld [vmem:[%s348 + $0x8] sm:$0x7]
        %v408 = vlaneseq
        %v409 = vshrl.u32 %v408, 7
        %v410 = vsub.s32 0, %v409
        %v411 = vrot.slane %v406, %v410
        %v412 = vmul.f32 %v370, %v411
        %v413 = vmul.f32 %v372, %v411
        %v414 = vmul.f32 %v374, %v411
        %v415 = vmul.f32 %v376, %v411
        %v416 = vmul.f32 %v378, %v411
        %v417 = vmul.f32 %v380, %v411
        %v418 = vmul.f32 %v382, %v411
        %v419 = vmul.f32 %v388, %v411
        %v420 = vmul.f32 %v390, %v411
        %v421 = vmul.f32 %v392, %v411
        %v422 = vmul.f32 %v394, %v411
        %v423 = vmul.f32 %v396, %v411
        %v424 = vmul.f32 %v398, %v411
        %v425 = vmul.f32 %v400, %v411
        %v426 = vlaneseq
        %v427 = vshrl.u32 %v426, 7
        %v428 = vsub.s32 1, %v427
        %v429 = vrot.slane %v406, %v428
        %v430 = vmul.f32 %v370, %v429
        %v431 = vmul.f32 %v372, %v429
        %v432 = vmul.f32 %v374, %v429
        %v433 = vmul.f32 %v376, %v429
        %v434 = vmul.f32 %v378, %v429
        %v435 = vmul.f32 %v380, %v429
        %v436 = vmul.f32 %v382, %v429
        %v437 = vmul.f32 %v388, %v429
        %v438 = vmul.f32 %v390, %v429
        %v439 = vmul.f32 %v392, %v429
        %v440 = vmul.f32 %v394, %v429
        %v441 = vmul.f32 %v396, %v429
        %v442 = vmul.f32 %v398, %v429
        %v443 = vmul.f32 %v400, %v429
        %v458 = vrot.slane %v430, 1
        %v459 = vrot.slane %v431, 1
        %v460 = vrot.slane %v432, 1
        %v461 = vrot.slane %v433, 1
        %v462 = vrot.slane %v434, 1
        %v463 = vrot.slane %v435, 1
        %v464 = vrot.slane %v436, 1
        %v465 = vrot.slane %v437, 1
        %v466 = vrot.slane %v438, 1
        %v467 = vrot.slane %v439, 1
        %v468 = vrot.slane %v440, 1
        %v469 = vrot.slane %v441, 1
        %v470 = vrot.slane %v442, 1
        %v471 = vrot.slane %v443, 1
        %v486 = vadd.f32 %v412, %v458
        %v487 = vadd.f32 %v413, %v459
        %v488 = vadd.f32 %v414, %v460
        %v489 = vadd.f32 %v415, %v461
        %v490 = vadd.f32 %v416, %v462
        %v491 = vadd.f32 %v417, %v463
        %v492 = vadd.f32 %v418, %v464
        %v493 = vadd.f32 %v419, %v465
        %v494 = vadd.f32 %v420, %v466
        %v495 = vadd.f32 %v421, %v467
        %v496 = vadd.f32 %v422, %v468
        %v497 = vadd.f32 %v423, %v469
        %v498 = vadd.f32 %v424, %v470
        %v499 = vadd.f32 %v425, %v471
        %v500 = vlaneseq
        %v501 = vshrl.u32 %v500, 7
        %v502 = vsub.s32 2, %v501
        %v503 = vrot.slane %v406, %v502
        %v504 = vmul.f32 %v370, %v503
        %v505 = vmul.f32 %v371, %v503
        %v506 = vmul.f32 %v372, %v503
        %v507 = vmul.f32 %v373, %v503
        %v508 = vmul.f32 %v374, %v503
        %v509 = vmul.f32 %v375, %v503
        %v510 = vmul.f32 %v376, %v503
        %v511 = vmul.f32 %v377, %v503
        %v512 = vmul.f32 %v378, %v503
        %v513 = vmul.f32 %v379, %v503
        %v514 = vmul.f32 %v380, %v503
        %v515 = vmul.f32 %v381, %v503
        %v516 = vmul.f32 %v382, %v503
        %v517 = vmul.f32 %v383, %v503
        %v518 = vmul.f32 %v388, %v503
        %v519 = vmul.f32 %v389, %v503
        %v520 = vmul.f32 %v390, %v503
        %v521 = vmul.f32 %v391, %v503
        %v522 = vmul.f32 %v392, %v503
        %v523 = vmul.f32 %v393, %v503
        %v524 = vmul.f32 %v394, %v503
        %v525 = vmul.f32 %v395, %v503
        %v526 = vmul.f32 %v396, %v503
        %v527 = vmul.f32 %v397, %v503
        %v528 = vmul.f32 %v398, %v503
        %v529 = vmul.f32 %v399, %v503
        %v530 = vmul.f32 %v400, %v503
        %v531 = vmul.f32 %v401, %v503
        %vm560 = vcmask 1045504
        %v561 = vrot.slane %v504, 2
        %v562 = vrot.slane %v505, 2
        %v563 = vsel %vm560, %v561, %v562
        %v564 = vrot.slane %v506, 2
        %v565 = vrot.slane %v507, 2
        %v566 = vsel %vm560, %v564, %v565
        %v567 = vrot.slane %v508, 2
        %v568 = vrot.slane %v509, 2
        %v569 = vsel %vm560, %v567, %v568
        %v570 = vrot.slane %v510, 2
        %v571 = vrot.slane %v511, 2
        %v572 = vsel %vm560, %v570, %v571
        %v573 = vrot.slane %v512, 2
        %v574 = vrot.slane %v513, 2
        %v575 = vsel %vm560, %v573, %v574
        %v576 = vrot.slane %v514, 2
        %v577 = vrot.slane %v515, 2
        %v578 = vsel %vm560, %v576, %v577
        %v579 = vrot.slane %v516, 2
        %v580 = vrot.slane %v517, 2
        %v581 = vsel %vm560, %v579, %v580
        %v582 = vrot.slane %v518, 2
        %v583 = vrot.slane %v519, 2
        %v584 = vsel %vm560, %v582, %v583
        %v585 = vrot.slane %v520, 2
        %v586 = vrot.slane %v521, 2
        %v587 = vsel %vm560, %v585, %v586
        %v588 = vrot.slane %v522, 2
        %v589 = vrot.slane %v523, 2
        %v590 = vsel %vm560, %v588, %v589
        %v591 = vrot.slane %v524, 2
        %v592 = vrot.slane %v525, 2
        %v593 = vsel %vm560, %v591, %v592
        %v594 = vrot.slane %v526, 2
        %v595 = vrot.slane %v527, 2
        %v596 = vsel %vm560, %v594, %v595
        %v597 = vrot.slane %v528, 2
        %v598 = vrot.slane %v529, 2
        %v599 = vsel %vm560, %v597, %v598
        %v600 = vrot.slane %v530, 2
        %v601 = vrot.slane %v531, 2
        %v602 = vsel %vm560, %v600, %v601
        %v617 = vadd.f32 %v486, %v563
        %v618 = vadd.f32 %v487, %v566
        %v619 = vadd.f32 %v488, %v569
        %v620 = vadd.f32 %v489, %v572
        %v621 = vadd.f32 %v490, %v575
        %v622 = vadd.f32 %v491, %v578
        %v623 = vadd.f32 %v492, %v581
        %v624 = vadd.f32 %v493, %v584
        %v625 = vadd.f32 %v494, %v587
        %v626 = vadd.f32 %v495, %v590
        %v627 = vadd.f32 %v496, %v593
        %v628 = vadd.f32 %v497, %v596
        %v629 = vadd.f32 %v498, %v599
        %v630 = vadd.f32 %v499, %v602
        %v631 = vlaneseq
        %v632 = vshrl.u32 %v631, 7
        %v633 = vsub.s32 3, %v632
        %v634 = vrot.slane %v406, %v633
        %v635 = vmul.f32 %v372, %v634
        %v636 = vmul.f32 %v374, %v634
        %v637 = vmul.f32 %v376, %v634
        %v638 = vmul.f32 %v378, %v634
        %v639 = vmul.f32 %v380, %v634
        %v640 = vmul.f32 %v382, %v634
        %v641 = vmul.f32 %v384, %v634
        %v642 = vmul.f32 %v390, %v634
        %v643 = vmul.f32 %v392, %v634
        %v644 = vmul.f32 %v394, %v634
        %v645 = vmul.f32 %v396, %v634
        %v646 = vmul.f32 %v398, %v634
        %v647 = vmul.f32 %v400, %v634
        %v648 = vmul.f32 %v402, %v634
        %v649 = vadd.f32 %v617, %v635
        %v650 = vadd.f32 %v618, %v636
        %v651 = vadd.f32 %v619, %v637
        %v652 = vadd.f32 %v620, %v638
        %v653 = vadd.f32 %v621, %v639
        %v654 = vadd.f32 %v622, %v640
        %v655 = vadd.f32 %v623, %v641
        %v656 = vadd.f32 %v624, %v642
        %v657 = vadd.f32 %v625, %v643
        %v658 = vadd.f32 %v626, %v644
        %v659 = vadd.f32 %v627, %v645
        %v660 = vadd.f32 %v628, %v646
        %v661 = vadd.f32 %v629, %v647
        %v662 = vadd.f32 %v630, %v648
        %v663 = vlaneseq
        %v664 = vshrl.u32 %v663, 7
        %v665 = vsub.s32 4, %v664
        %v666 = vrot.slane %v406, %v665
        %v667 = vmul.f32 %v372, %v666
        %v668 = vmul.f32 %v374, %v666
        %v669 = vmul.f32 %v376, %v666
        %v670 = vmul.f32 %v378, %v666
        %v671 = vmul.f32 %v380, %v666
        %v672 = vmul.f32 %v382, %v666
        %v673 = vmul.f32 %v384, %v666
        %v674 = vmul.f32 %v390, %v666
        %v675 = vmul.f32 %v392, %v666
        %v676 = vmul.f32 %v394, %v666
        %v677 = vmul.f32 %v396, %v666
        %v678 = vmul.f32 %v398, %v666
        %v679 = vmul.f32 %v400, %v666
        %v680 = vmul.f32 %v402, %v666
        %v695 = vrot.slane %v667, 1
        %v696 = vrot.slane %v668, 1
        %v697 = vrot.slane %v669, 1
        %v698 = vrot.slane %v670, 1
        %v699 = vrot.slane %v671, 1
        %v700 = vrot.slane %v672, 1
        %v701 = vrot.slane %v673, 1
        %v702 = vrot.slane %v674, 1
        %v703 = vrot.slane %v675, 1
        %v704 = vrot.slane %v676, 1
        %v705 = vrot.slane %v677, 1
        %v706 = vrot.slane %v678, 1
        %v707 = vrot.slane %v679, 1
        %v708 = vrot.slane %v680, 1
        %v723 = vadd.f32 %v649, %v695
        %v724 = vadd.f32 %v650, %v696
        %v725 = vadd.f32 %v651, %v697
        %v726 = vadd.f32 %v652, %v698
        %v727 = vadd.f32 %v653, %v699
        %v728 = vadd.f32 %v654, %v700
        %v729 = vadd.f32 %v655, %v701
        %v730 = vadd.f32 %v656, %v702
        %v731 = vadd.f32 %v657, %v703
        %v732 = vadd.f32 %v658, %v704
        %v733 = vadd.f32 %v659, %v705
        %v734 = vadd.f32 %v660, %v706
        %v735 = vadd.f32 %v661, %v707
        %v736 = vadd.f32 %v662, %v708
        %v737 = vlaneseq
        %v738 = vshrl.u32 %v737, 7
        %v739 = vsub.s32 5, %v738
        %v740 = vrot.slane %v406, %v739
        %v741 = vmul.f32 %v372, %v740
        %v742 = vmul.f32 %v373, %v740
        %v743 = vmul.f32 %v374, %v740
        %v744 = vmul.f32 %v375, %v740
        %v745 = vmul.f32 %v376, %v740
        %v746 = vmul.f32 %v377, %v740
        %v747 = vmul.f32 %v378, %v740
        %v748 = vmul.f32 %v379, %v740
        %v749 = vmul.f32 %v380, %v740
        %v750 = vmul.f32 %v381, %v740
        %v751 = vmul.f32 %v382, %v740
        %v752 = vmul.f32 %v383, %v740
        %v753 = vmul.f32 %v384, %v740
        %v754 = vmul.f32 %v385, %v740
        %v755 = vmul.f32 %v390, %v740
        %v756 = vmul.f32 %v391, %v740
        %v757 = vmul.f32 %v392, %v740
        %v758 = vmul.f32 %v393, %v740
        %v759 = vmul.f32 %v394, %v740
        %v760 = vmul.f32 %v395, %v740
        %v761 = vmul.f32 %v396, %v740
        %v762 = vmul.f32 %v397, %v740
        %v763 = vmul.f32 %v398, %v740
        %v764 = vmul.f32 %v399, %v740
        %v765 = vmul.f32 %v400, %v740
        %v766 = vmul.f32 %v401, %v740
        %v767 = vmul.f32 %v402, %v740
        %v768 = vmul.f32 %v403, %v740
        %v797 = vrot.slane %v741, 2
        %v798 = vrot.slane %v742, 2
        %v799 = vsel %vm560, %v797, %v798
        %v800 = vrot.slane %v743, 2
        %v801 = vrot.slane %v744, 2
        %v802 = vsel %vm560, %v800, %v801
        %v803 = vrot.slane %v745, 2
        %v804 = vrot.slane %v746, 2
        %v805 = vsel %vm560, %v803, %v804
        %v806 = vrot.slane %v747, 2
        %v807 = vrot.slane %v748, 2
        %v808 = vsel %vm560, %v806, %v807
        %v809 = vrot.slane %v749, 2
        %v810 = vrot.slane %v750, 2
        %v811 = vsel %vm560, %v809, %v810
        %v812 = vrot.slane %v751, 2
        %v813 = vrot.slane %v752, 2
        %v814 = vsel %vm560, %v812, %v813
        %v815 = vrot.slane %v753, 2
        %v816 = vrot.slane %v754, 2
        %v817 = vsel %vm560, %v815, %v816
        %v818 = vrot.slane %v755, 2
        %v819 = vrot.slane %v756, 2
        %v820 = vsel %vm560, %v818, %v819
        %v821 = vrot.slane %v757, 2
        %v822 = vrot.slane %v758, 2
        %v823 = vsel %vm560, %v821, %v822
        %v824 = vrot.slane %v759, 2
        %v825 = vrot.slane %v760, 2
        %v826 = vsel %vm560, %v824, %v825
        %v827 = vrot.slane %v761, 2
        %v828 = vrot.slane %v762, 2
        %v829 = vsel %vm560, %v827, %v828
        %v830 = vrot.slane %v763, 2
        %v831 = vrot.slane %v764, 2
        %v832 = vsel %vm560, %v830, %v831
        %v833 = vrot.slane %v765, 2
        %v834 = vrot.slane %v766, 2
        %v835 = vsel %vm560, %v833, %v834
        %v836 = vrot.slane %v767, 2
        %v837 = vrot.slane %v768, 2
        %v838 = vsel %vm560, %v836, %v837
        %v853 = vadd.f32 %v723, %v799
        %v854 = vadd.f32 %v724, %v802
        %v855 = vadd.f32 %v725, %v805
        %v856 = vadd.f32 %v726, %v808
        %v857 = vadd.f32 %v727, %v811
        %v858 = vadd.f32 %v728, %v814
        %v859 = vadd.f32 %v729, %v817
        %v860 = vadd.f32 %v730, %v820
        %v861 = vadd.f32 %v731, %v823
        %v862 = vadd.f32 %v732, %v826
        %v863 = vadd.f32 %v733, %v829
        %v864 = vadd.f32 %v734, %v832
        %v865 = vadd.f32 %v735, %v835
        %v866 = vadd.f32 %v736, %v838
        %v867 = vlaneseq
        %v868 = vshrl.u32 %v867, 7
        %v869 = vsub.s32 6, %v868
        %v870 = vrot.slane %v406, %v869
        %v871 = vmul.f32 %v374, %v870
        %v872 = vmul.f32 %v376, %v870
        %v873 = vmul.f32 %v378, %v870
        %v874 = vmul.f32 %v380, %v870
        %v875 = vmul.f32 %v382, %v870
        %v876 = vmul.f32 %v384, %v870
        %v877 = vmul.f32 %v386, %v870
        %v878 = vmul.f32 %v392, %v870
        %v879 = vmul.f32 %v394, %v870
        %v880 = vmul.f32 %v396, %v870
        %v881 = vmul.f32 %v398, %v870
        %v882 = vmul.f32 %v400, %v870
        %v883 = vmul.f32 %v402, %v870
        %v884 = vmul.f32 %v404, %v870
        %v885 = vadd.f32 %v853, %v871
        %v886 = vadd.f32 %v854, %v872
        %v887 = vadd.f32 %v855, %v873
        %v888 = vadd.f32 %v856, %v874
        %v889 = vadd.f32 %v857, %v875
        %v890 = vadd.f32 %v858, %v876
        %v891 = vadd.f32 %v859, %v877
        %v892 = vadd.f32 %v860, %v878
        %v893 = vadd.f32 %v861, %v879
        %v894 = vadd.f32 %v862, %v880
        %v895 = vadd.f32 %v863, %v881
        %v896 = vadd.f32 %v864, %v882
        %v897 = vadd.f32 %v865, %v883
        %v898 = vadd.f32 %v866, %v884
        %v899 = vlaneseq
        %v900 = vshrl.u32 %v899, 7
        %v901 = vsub.s32 7, %v900
        %v902 = vrot.slane %v406, %v901
        %v903 = vmul.f32 %v374, %v902
        %v904 = vmul.f32 %v376, %v902
        %v905 = vmul.f32 %v378, %v902
        %v906 = vmul.f32 %v380, %v902
        %v907 = vmul.f32 %v382, %v902
        %v908 = vmul.f32 %v384, %v902
        %v909 = vmul.f32 %v386, %v902
        %v910 = vmul.f32 %v392, %v902
        %v911 = vmul.f32 %v394, %v902
        %v912 = vmul.f32 %v396, %v902
        %v913 = vmul.f32 %v398, %v902
        %v914 = vmul.f32 %v400, %v902
        %v915 = vmul.f32 %v402, %v902
        %v916 = vmul.f32 %v404, %v902
        %v931 = vrot.slane %v903, 1
        %v932 = vrot.slane %v904, 1
        %v933 = vrot.slane %v905, 1
        %v934 = vrot.slane %v906, 1
        %v935 = vrot.slane %v907, 1
        %v936 = vrot.slane %v908, 1
        %v937 = vrot.slane %v909, 1
        %v938 = vrot.slane %v910, 1
        %v939 = vrot.slane %v911, 1
        %v940 = vrot.slane %v912, 1
        %v941 = vrot.slane %v913, 1
        %v942 = vrot.slane %v914, 1
        %v943 = vrot.slane %v915, 1
        %v944 = vrot.slane %v916, 1
        %v959 = vadd.f32 %v885, %v931
        %v960 = vadd.f32 %v886, %v932
        %v961 = vadd.f32 %v887, %v933
        %v962 = vadd.f32 %v888, %v934
        %v963 = vadd.f32 %v889, %v935
        %v964 = vadd.f32 %v890, %v936
        %v965 = vadd.f32 %v891, %v937
        %v966 = vadd.f32 %v892, %v938
        %v967 = vadd.f32 %v893, %v939
        %v968 = vadd.f32 %v894, %v940
        %v969 = vadd.f32 %v895, %v941
        %v970 = vadd.f32 %v896, %v942
        %v971 = vadd.f32 %v897, %v943
        %v972 = vadd.f32 %v898, %v944
        %v973 = vlaneseq
        %v974 = vshrl.u32 %v973, 7
        %v975 = vsub.s32 0, %v974
        %v976 = vrot.slane %v407, %v975
        %v977 = vmul.f32 %v374, %v976
        %v978 = vmul.f32 %v375, %v976
        %v979 = vmul.f32 %v376, %v976
        %v980 = vmul.f32 %v377, %v976
        %v981 = vmul.f32 %v378, %v976
        %v982 = vmul.f32 %v379, %v976
        %v983 = vmul.f32 %v380, %v976
        %v984 = vmul.f32 %v381, %v976
        %v985 = vmul.f32 %v382, %v976
        %v986 = vmul.f32 %v383, %v976
        %v987 = vmul.f32 %v384, %v976
        %v988 = vmul.f32 %v385, %v976
        %v989 = vmul.f32 %v386, %v976
        %v990 = vmul.f32 %v387, %v976
        %v991 = vmul.f32 %v392, %v976
        %v992 = vmul.f32 %v393, %v976
        %v993 = vmul.f32 %v394, %v976
        %v994 = vmul.f32 %v395, %v976
        %v995 = vmul.f32 %v396, %v976
        %v996 = vmul.f32 %v397, %v976
        %v997 = vmul.f32 %v398, %v976
        %v998 = vmul.f32 %v399, %v976
        %v999 = vmul.f32 %v400, %v976
        %v1000 = vmul.f32 %v401, %v976
        %v1001 = vmul.f32 %v402, %v976
        %v1002 = vmul.f32 %v403, %v976
        %v1003 = vmul.f32 %v404, %v976
        %v1004 = vmul.f32 %v405, %v976
        %v1033 = vrot.slane %v977, 2
        %v1034 = vrot.slane %v978, 2
        %v1035 = vsel %vm560, %v1033, %v1034
        %v1036 = vrot.slane %v979, 2
        %v1037 = vrot.slane %v980, 2
        %v1038 = vsel %vm560, %v1036, %v1037
        %v1039 = vrot.slane %v981, 2
        %v1040 = vrot.slane %v982, 2
        %v1041 = vsel %vm560, %v1039, %v1040
        %v1042 = vrot.slane %v983, 2
        %v1043 = vrot.slane %v984, 2
        %v1044 = vsel %vm560, %v1042, %v1043
        %v1045 = vrot.slane %v985, 2
        %v1046 = vrot.slane %v986, 2
        %v1047 = vsel %vm560, %v1045, %v1046
        %v1048 = vrot.slane %v987, 2
        %v1049 = vrot.slane %v988, 2
        %v1050 = vsel %vm560, %v1048, %v1049
        %v1051 = vrot.slane %v989, 2
        %v1052 = vrot.slane %v990, 2
        %v1053 = vsel %vm560, %v1051, %v1052
        %v1054 = vrot.slane %v991, 2
        %v1055 = vrot.slane %v992, 2
        %v1056 = vsel %vm560, %v1054, %v1055
        %v1057 = vrot.slane %v993, 2
        %v1058 = vrot.slane %v994, 2
        %v1059 = vsel %vm560, %v1057, %v1058
        %v1060 = vrot.slane %v995, 2
        %v1061 = vrot.slane %v996, 2
        %v1062 = vsel %vm560, %v1060, %v1061
        %v1063 = vrot.slane %v997, 2
        %v1064 = vrot.slane %v998, 2
        %v1065 = vsel %vm560, %v1063, %v1064
        %v1066 = vrot.slane %v999, 2
        %v1067 = vrot.slane %v1000, 2
        %v1068 = vsel %vm560, %v1066, %v1067
        %v1069 = vrot.slane %v1001, 2
        %v1070 = vrot.slane %v1002, 2
        %v1071 = vsel %vm560, %v1069, %v1070
        %v1072 = vrot.slane %v1003, 2
        %v1073 = vrot.slane %v1004, 2
        %v1074 = vsel %vm560, %v1072, %v1073
        %v1089 = vadd.f32 %v959, %v1035
        %v1090 = vadd.f32 %v960, %v1038
        %v1091 = vadd.f32 %v961, %v1041
        %v1092 = vadd.f32 %v962, %v1044
        %v1093 = vadd.f32 %v963, %v1047
        %v1094 = vadd.f32 %v964, %v1050
        %v1095 = vadd.f32 %v965, %v1053
        %v1096 = vadd.f32 %v966, %v1056
        %v1097 = vadd.f32 %v967, %v1059
        %v1098 = vadd.f32 %v968, %v1062
        %v1099 = vadd.f32 %v969, %v1065
        %v1100 = vadd.f32 %v970, %v1068
        %v1101 = vadd.f32 %v971, %v1071
        %v1102 = vadd.f32 %v972, %v1074
        %vm1103 = vcmask 1046528
        %v1104 = vsel %vm1103, %v1089, 0.0
        %v1105 = vsel %vm1103, %v1090, 0.0
        %v1106 = vadd.f32 %v1104, %v1105
        %v1107 = vsel %vm1103, %v1091, 0.0
        %v1108 = vadd.f32 %v1106, %v1107
        %v1109 = vsel %vm1103, %v1092, 0.0
        %v1110 = vadd.f32 %v1108, %v1109
        %v1111 = vsel %vm1103, %v1093, 0.0
        %v1112 = vadd.f32 %v1110, %v1111
        %v1113 = vsel %vm1103, %v1094, 0.0
        %v1114 = vadd.f32 %v1112, %v1113
        %v1115 = vsel %vm1103, %v1095, 0.0
        %v1116 = vadd.f32 %v1114, %v1115
        %v1117 = vsel %vm1103, %v1096, 0.0
        %v1118 = vadd.f32 %v1116, %v1117
        %v1119 = vsel %vm1103, %v1097, 0.0
        %v1120 = vadd.f32 %v1118, %v1119
        %v1121 = vsel %vm1103, %v1098, 0.0
        %v1122 = vadd.f32 %v1120, %v1121
        %v1123 = vsel %vm1103, %v1099, 0.0
        %v1124 = vadd.f32 %v1122, %v1123
        %v1125 = vsel %vm1103, %v1100, 0.0
        %v1126 = vadd.f32 %v1124, %v1125
        %v1127 = vsel %vm1103, %v1101, 0.0
        %v1128 = vadd.f32 %v1126, %v1127
        %v1129 = vsel %vm1103, %v1102, 0.0
        %v1130 = vadd.f32 %v1128, %v1129
        %v1131 = vrot.slane %v1130, 4
        %v1132 = vadd.f32 %v1130, %v1131
        %v1133 = vrot.slane %v1132, 2
        %v1134 = vadd.f32 %v1132, %v1133
        %v1135 = vrot.slane %v1134, 1
        %v1136 = vadd.f32 %v1134, %v1135
        %v1137 = vrcp.pop 98.0
        %v1138 = vmul.f32 %v1136, %v1137
        %v1139 = vsub.f32 %v1089, %v1138
        %v1140 = vsub.f32 %v1090, %v1138
        %v1141 = vsub.f32 %v1091, %v1138
        %v1142 = vsub.f32 %v1092, %v1138
        %v1143 = vsub.f32 %v1093, %v1138
        %v1144 = vsub.f32 %v1094, %v1138
        %v1145 = vsub.f32 %v1095, %v1138
        %v1146 = vsub.f32 %v1096, %v1138
        %v1147 = vsub.f32 %v1097, %v1138
        %v1148 = vsub.f32 %v1098, %v1138
        %v1149 = vsub.f32 %v1099, %v1138
        %v1150 = vsub.f32 %v1100, %v1138
        %v1151 = vsub.f32 %v1101, %v1138
        %v1152 = vsub.f32 %v1102, %v1138
        %v1153 = vmul.f32 %v1139, %v1139
        %v1154 = vmul.f32 %v1140, %v1140
        %v1155 = vmul.f32 %v1141, %v1141
        %v1156 = vmul.f32 %v1142, %v1142
        %v1157 = vmul.f32 %v1143, %v1143
        %v1158 = vmul.f32 %v1144, %v1144
        %v1159 = vmul.f32 %v1145, %v1145
        %v1160 = vmul.f32 %v1146, %v1146
        %v1161 = vmul.f32 %v1147, %v1147
        %v1162 = vmul.f32 %v1148, %v1148
        %v1163 = vmul.f32 %v1149, %v1149
        %v1164 = vmul.f32 %v1150, %v1150
        %v1165 = vmul.f32 %v1151, %v1151
        %v1166 = vmul.f32 %v1152, %v1152
        %v1167 = vsel %vm1103, %v1153, 0.0
        %v1168 = vsel %vm1103, %v1154, 0.0
        %v1169 = vadd.f32 %v1167, %v1168
        %v1170 = vsel %vm1103, %v1155, 0.0
        %v1171 = vadd.f32 %v1169, %v1170
        %v1172 = vsel %vm1103, %v1156, 0.0
        %v1173 = vadd.f32 %v1171, %v1172
        %v1174 = vsel %vm1103, %v1157, 0.0
        %v1175 = vadd.f32 %v1173, %v1174
        %v1176 = vsel %vm1103, %v1158, 0.0
        %v1177 = vadd.f32 %v1175, %v1176
        %v1178 = vsel %vm1103, %v1159, 0.0
        %v1179 = vadd.f32 %v1177, %v1178
        %v1180 = vsel %vm1103, %v1160, 0.0
        %v1181 = vadd.f32 %v1179, %v1180
        %v1182 = vsel %vm1103, %v1161, 0.0
        %v1183 = vadd.f32 %v1181, %v1182
        %v1184 = vsel %vm1103, %v1162, 0.0
        %v1185 = vadd.f32 %v1183, %v1184
        %v1186 = vsel %vm1103, %v1163, 0.0
        %v1187 = vadd.f32 %v1185, %v1186
        %v1188 = vsel %vm1103, %v1164, 0.0
        %v1189 = vadd.f32 %v1187, %v1188
        %v1190 = vsel %vm1103, %v1165, 0.0
        %v1191 = vadd.f32 %v1189, %v1190
        %v1192 = vsel %vm1103, %v1166, 0.0
        %v1193 = vadd.f32 %v1191, %v1192
        %v1194 = vrot.slane %v1193, 4
        %v1195 = vadd.f32 %v1193, %v1194
        %v1196 = vrot.slane %v1195, 2
        %v1197 = vadd.f32 %v1195, %v1196
        %v1198 = vrot.slane %v1197, 1
        %v1199 = vadd.f32 %v1197, %v1198
        %v1200 = vmul.f32 %v1199, %v1137
        %v1201 = vadd.f32 %v1200, 0.001
        %v1202 = vrsqrt.pop %v1201
        %v1203 = vmul.f32 %v407, %v1202
        %v1204 = vlaneseq
        %v1205 = vshrl.u32 %v1204, 7
        %v1206 = vsub.s32 1, %v1205
        %v1207 = vrot.slane %v1203, %v1206
        %v1208 = vmul.f32 %v1139, %v1207
        %v1209 = vmul.f32 %v1140, %v1207
        %v1210 = vmul.f32 %v1141, %v1207
        %v1211 = vmul.f32 %v1142, %v1207
        %v1212 = vmul.f32 %v1143, %v1207
        %v1213 = vmul.f32 %v1144, %v1207
        %v1214 = vmul.f32 %v1145, %v1207
        %v1215 = vmul.f32 %v1146, %v1207
        %v1216 = vmul.f32 %v1147, %v1207
        %v1217 = vmul.f32 %v1148, %v1207
        %v1218 = vmul.f32 %v1149, %v1207
        %v1219 = vmul.f32 %v1150, %v1207
        %v1220 = vmul.f32 %v1151, %v1207
        %v1221 = vmul.f32 %v1152, %v1207
        %v1222 = vlaneseq
        %v1223 = vshrl.u32 %v1222, 7
        %v1224 = vsub.s32 2, %v1223
        %v1225 = vrot.slane %v407, %v1224
        %v1226 = vadd.f32 %v1208, %v1225
        %v1227 = vadd.f32 %v1209, %v1225
        %v1228 = vadd.f32 %v1210, %v1225
        %v1229 = vadd.f32 %v1211, %v1225
        %v1230 = vadd.f32 %v1212, %v1225
        %v1231 = vadd.f32 %v1213, %v1225
        %v1232 = vadd.f32 %v1214, %v1225
        %v1233 = vadd.f32 %v1215, %v1225
        %v1234 = vadd.f32 %v1216, %v1225
        %v1235 = vadd.f32 %v1217, %v1225
        %v1236 = vadd.f32 %v1218, %v1225
        %v1237 = vadd.f32 %v1219, %v1225
        %v1238 = vadd.f32 %v1220, %v1225
        %v1239 = vadd.f32 %v1221, %v1225
        %1240 = vst [vmem:[%s369] sm:$0x7f] %v1226
        %1241 = vst [vmem:[%s369 + $0x8] sm:$0x7f] %v1227
        %1242 = vst [vmem:[%s369 + $0x10] sm:$0x7f] %v1228
        %1243 = vst [vmem:[%s369 + $0x18] sm:$0x7f] %v1229
        %1244 = vst [vmem:[%s369 + $0x20] sm:$0x7f] %v1230
        %1245 = vst [vmem:[%s369 + $0x28] sm:$0x7f] %v1231
        %1246 = vst [vmem:[%s369 + $0x30] sm:$0x7f] %v1232
        %1247 = vst [vmem:[%s369 + $0x38] sm:$0x7f] %v1233
        %1248 = vst [vmem:[%s369 + $0x40] sm:$0x7f] %v1234
        %1249 = vst [vmem:[%s369 + $0x48] sm:$0x7f] %v1235
        %1250 = vst [vmem:[%s369 + $0x50] sm:$0x7f] %v1236
        %1251 = vst [vmem:[%s369 + $0x58] sm:$0x7f] %v1237
        %1252 = vst [vmem:[%s369 + $0x60] sm:$0x7f] %v1238
        %1253 = vst [vmem:[%s369 + $0x68] sm:$0x7f] %v1239
        %s1254 = sand.u32 %s73, 1
        %s1255 = sand.u32 %s73, 1
        %s1256 = smul.addr %s1255, 112
        %s1257 = scalar_lea.vmem [#allocation4], %s1256
        // Predicated region
        $region105: #{dwconv3x3_bn.1} parent=95 // pred_check
          %p1258 = pneg %p83
        $region106: #{dwconv3x3_bn.1} parent=95 // pred_check_branch
          %1260 = sbr.rel (%p1258) target = $region108
        $region107: #{dwconv3x3_bn.1} parent=95 // pred_region
          %s1261 = smul.addr %s13, 8
          %s1262 = scalar_lea.vmem %s2, %s1261
          // Predicated region
          $region109: #{dwconv3x3_bn.1} parent=107 // pred_check
            _
          $region110: #{dwconv3x3_bn.1} parent=107 // pred_check_branch
            %1264 = sbr.rel (0) target = $region112
          $region111: #{dwconv3x3_bn.1} parent=107 // pred_region
            // Predicated region
            $region113: #{dwconv3x3_bn.1} parent=111 // pred_check
              _
            $region114: #{dwconv3x3_bn.1} parent=111 // pred_check_branch
              %1266 = sbr.rel (0) target = $region116
            $region115: #{dwconv3x3_bn.1} parent=111 // pred_region
              // Predicated region
              $region128: #{dwconv3x3_bn.1} parent=115 // pred_check
                _
              $region129: #{dwconv3x3_bn.1} parent=115 // pred_check_branch
                %1307 = sbr.rel (0) target = $region131
              $region130: #{dwconv3x3_bn.1} parent=115 // pred_region
                loop: start=0, step=1, limit=1
                $region132: #{dwconv3x3_bn.1} parent=130 // loop_pre_header
                  _
                $region133: #{dwconv3x3_bn.1} parent=130 // loop_header
                  %s1309 = sphi 0, %s1313
                  %p1310 = scmp.ge.s32.totalorder %s1309, 1
                  %s1314 = sphi %s1257, %s1257
                  %s1315 = sphi %s1262, %s1262
                $region134: #{dwconv3x3_bn.1} parent=130 // loop_header_branch
                  %1312 = sbr.rel (%p1310) target = $region138
                $region135: #{dwconv3x3_bn.1} parent=130 // loop_body
                  %v1316 = vld [vmem:[%s1314] sm:$0xff]
                  %1317 = vst [vmem:[%s1315] sm:$0xff] %v1316
                  %v1318 = vld [vmem:[%s1314 + $0x8] sm:$0xff]
                  %1319 = vst [vmem:[%s1315 + $0x10] sm:$0xff] %v1318
                  %v1320 = vld [vmem:[%s1314 + $0x10] sm:$0xff]
                  %1321 = vst [vmem:[%s1315 + $0x20] sm:$0xff] %v1320
                  %v1322 = vld [vmem:[%s1314 + $0x18] sm:$0xff]
                  %1323 = vst [vmem:[%s1315 + $0x30] sm:$0xff] %v1322
                  %v1324 = vld [vmem:[%s1314 + $0x20] sm:$0xff]
                  %1325 = vst [vmem:[%s1315 + $0x40] sm:$0xff] %v1324
                  %v1326 = vld [vmem:[%s1314 + $0x28] sm:$0xff]
                  %1327 = vst [vmem:[%s1315 + $0x50] sm:$0xff] %v1326
                  %v1328 = vld [vmem:[%s1314 + $0x30] sm:$0xff]
                  %1329 = vst [vmem:[%s1315 + $0x60] sm:$0xff] %v1328
                  %v1330 = vld [vmem:[%s1314 + $0x38] sm:$0xff]
                  %1331 = vst [vmem:[%s1315 + $0x70] sm:$0xff] %v1330
                  %v1332 = vld [vmem:[%s1314 + $0x40] sm:$0xff]
                  %1333 = vst [vmem:[%s1315 + $0x80] sm:$0xff] %v1332
                  %v1334 = vld [vmem:[%s1314 + $0x48] sm:$0xff]
                  %1335 = vst [vmem:[%s1315 + $0x90] sm:$0xff] %v1334
                  %v1336 = vld [vmem:[%s1314 + $0x50] sm:$0xff]
                  %1337 = vst [vmem:[%s1315 + $0xa0] sm:$0xff] %v1336
                  %v1338 = vld [vmem:[%s1314 + $0x58] sm:$0xff]
                  %1339 = vst [vmem:[%s1315 + $0xb0] sm:$0xff] %v1338
                  %v1340 = vld [vmem:[%s1314 + $0x60] sm:$0xff]
                  %1341 = vst [vmem:[%s1315 + $0xc0] sm:$0xff] %v1340
                  %v1342 = vld [vmem:[%s1314 + $0x68] sm:$0xff]
                  %1343 = vst [vmem:[%s1315 + $0xd0] sm:$0xff] %v1342
                $region136: #{dwconv3x3_bn.1} parent=130 // loop_footer
                  %s1313 = sadd.s32 1, %s1309
                $region137: #{dwconv3x3_bn.1} parent=130 // loop_footer_branch
                  %1308 = sbr.rel target = $region133
                $region138: #{dwconv3x3_bn.1} parent=130 // loop_exit
                  _
              $region131: #{dwconv3x3_bn.1} parent=115 // pred_fallthru
                _
              // Predicated region
              $region139: #{dwconv3x3_bn.1} parent=115 // pred_check
                _
              $region140: #{dwconv3x3_bn.1} parent=115 // pred_check_branch
                %1345 = sbr.rel target = $region142
              $region141: #{dwconv3x3_bn.1} parent=115 // pred_region
                _
              $region142: #{dwconv3x3_bn.1} parent=115 // pred_fallthru
                _
            $region116: #{dwconv3x3_bn.1} parent=111 // pred_fallthru
              _
            // Predicated region
            $region117: #{dwconv3x3_bn.1} parent=111 // pred_check
              _
            $region118: #{dwconv3x3_bn.1} parent=111 // pred_check_branch
              %1268 = sbr.rel target = $region120
            $region119: #{dwconv3x3_bn.1} parent=111 // pred_region
              loop: start=0, step=1, limit=1
              $region121: #{dwconv3x3_bn.1} parent=119 // loop_pre_header
                _
              $region122: #{dwconv3x3_bn.1} parent=119 // loop_header
                %s1271 = sphi 0, %s1275
                %p1272 = scmp.ge.s32.totalorder %s1271, 1
                %s1276 = sphi %s1257, %s1257
                %s1277 = sphi %s1262, %s1262
              $region123: #{dwconv3x3_bn.1} parent=119 // loop_header_branch
                %1274 = sbr.rel (%p1272) target = $region127
              $region124: #{dwconv3x3_bn.1} parent=119 // loop_body
                %v1278 = vld [vmem:[%s1276] sm:$0xff]
                %1279 = vst [vmem:[%s1277] sm:$0xff] %v1278
                %v1280 = vld [vmem:[%s1276 + $0x8] sm:$0xff]
                %1281 = vst [vmem:[%s1277 + $0x10] sm:$0xff] %v1280
                %v1282 = vld [vmem:[%s1276 + $0x10] sm:$0xff]
                %1283 = vst [vmem:[%s1277 + $0x20] sm:$0xff] %v1282
                %v1284 = vld [vmem:[%s1276 + $0x18] sm:$0xff]
                %1285 = vst [vmem:[%s1277 + $0x30] sm:$0xff] %v1284
                %v1286 = vld [vmem:[%s1276 + $0x20] sm:$0xff]
                %1287 = vst [vmem:[%s1277 + $0x40] sm:$0xff] %v1286
                %v1288 = vld [vmem:[%s1276 + $0x28] sm:$0xff]
                %1289 = vst [vmem:[%s1277 + $0x50] sm:$0xff] %v1288
                %v1290 = vld [vmem:[%s1276 + $0x30] sm:$0xff]
                %1291 = vst [vmem:[%s1277 + $0x60] sm:$0xff] %v1290
                %v1292 = vld [vmem:[%s1276 + $0x38] sm:$0xff]
                %1293 = vst [vmem:[%s1277 + $0x70] sm:$0xff] %v1292
                %v1294 = vld [vmem:[%s1276 + $0x40] sm:$0xff]
                %1295 = vst [vmem:[%s1277 + $0x80] sm:$0xff] %v1294
                %v1296 = vld [vmem:[%s1276 + $0x48] sm:$0xff]
                %1297 = vst [vmem:[%s1277 + $0x90] sm:$0xff] %v1296
                %v1298 = vld [vmem:[%s1276 + $0x50] sm:$0xff]
                %1299 = vst [vmem:[%s1277 + $0xa0] sm:$0xff] %v1298
                %v1300 = vld [vmem:[%s1276 + $0x58] sm:$0xff]
                %1301 = vst [vmem:[%s1277 + $0xb0] sm:$0xff] %v1300
                %v1302 = vld [vmem:[%s1276 + $0x60] sm:$0xff]
                %1303 = vst [vmem:[%s1277 + $0xc0] sm:$0xff] %v1302
                %v1304 = vld [vmem:[%s1276 + $0x68] sm:$0xff]
                %1305 = vst [vmem:[%s1277 + $0xd0] sm:$0xff] %v1304
              $region125: #{dwconv3x3_bn.1} parent=119 // loop_footer
                %s1275 = sadd.s32 1, %s1271
              $region126: #{dwconv3x3_bn.1} parent=119 // loop_footer_branch
                %1270 = sbr.rel target = $region122
              $region127: #{dwconv3x3_bn.1} parent=119 // loop_exit
                _
            $region120: #{dwconv3x3_bn.1} parent=111 // pred_fallthru
              _
          $region112: #{dwconv3x3_bn.1} parent=107 // pred_fallthru
            _
          %1346 = vnop
        $region108: #{dwconv3x3_bn.1} parent=95 // pred_fallthru
          _
      $region96: #{dwconv3x3_bn.1} parent=5 // pred_fallthru
        _
      %p1347 = scmp.le.s32.totalorder 2, %s8
      // Predicated region
      $region143: #{dwconv3x3_bn.1} parent=5 // pred_check
        %p1348 = pneg %p1347
      $region144: #{dwconv3x3_bn.1} parent=5 // pred_check_branch
        %1350 = sbr.rel (%p1348) target = $region146
      $region145: #{dwconv3x3_bn.1} parent=5 // pred_region
        %s1351 = ssub.s32 %s8, 2
        // Predicated region
        $region147: #{dwconv3x3_bn.1} parent=145 // pred_check
          %p1352 = pneg %p89
        $region148: #{dwconv3x3_bn.1} parent=145 // pred_check_branch
          %1354 = sbr.rel (%p1352) target = $region150
        $region149: #{dwconv3x3_bn.1} parent=145 // pred_region
          %s1355 = sand.u32 %s74, 1
          %s1356 = sand.u32 %s74, 1
          %s1357 = smul.addr %s1356, 112
          %s1358 = scalar_lea.vmem [#allocation4], %s1357
        $region150: #{dwconv3x3_bn.1} parent=145 // pred_fallthru
          _
      $region146: #{dwconv3x3_bn.1} parent=5 // pred_fallthru
        _
    $region6: #{dwconv3x3_bn.1} parent=1 // loop_footer
      %s12 = sadd.s32 1, %s8
    $region7: #{dwconv3x3_bn.1} parent=1 // loop_footer_branch
      %7 = sbr.rel target = $region3
    $region8: #{dwconv3x3_bn.1} parent=1 // loop_exit
      _

</llo_original>
